<compile_context>
chip_gen: v5e
topology: v5e:2x2
jax: 0.10.0
libtpu: 0.0.40
codegen_flags: <defaults>
</compile_context>

<pallas_src>
import jax
import jax.numpy as jnp
from jax.experimental import pallas as pl
from jax.experimental.pallas import tpu as pltpu

_INV_SQRT2 = 0.7071067811865476


# --------------------------------------------------------------------------- #
# Kernels
# --------------------------------------------------------------------------- #
def _gelu_exact(h):
    # erf-based GELU (matches torch.nn.GELU default); multiply, no divide.
    # TODO(synk): on v5e, if the VALU saturates on the erf polynomial, switch to
    # tanh-approx GELU (runs on the EUP slot) and accept the numerics delta.
    return 0.5 * h * (1.0 + jax.lax.erf(h * _INV_SQRT2))


def _mlp_kernel_resident(x_ref, w1_ref, b1_ref, w2_ref, b2_ref, o_ref):
    # Weights fully VMEM-resident (constant block index): single fused pass,
    # no accumulator scratch, no epilogue.
    x = x_ref[...]
    h = jnp.dot(x, w1_ref[...], preferred_element_type=jnp.float32) + b1_ref[...]
    h = _gelu_exact(h)
    y = jnp.dot(h.astype(x.dtype), w2_ref[...], preferred_element_type=jnp.float32)
    o_ref[...] = (y + b2_ref[...]).astype(o_ref.dtype)


def _mlp_kernel_stream_accout(x_ref, w1_ref, b1_ref, w2_ref, b2_ref, o_ref):
    # Streamed H chunks, f32 output block doubles as the accumulator
    # (its block index is constant over j, so it stays VMEM-resident).
    j = pl.program_id(1)

    @pl.when(j == 0)
    def _():
        o_ref[...] = jnp.zeros_like(o_ref)

    x = x_ref[...]
    h = jnp.dot(x, w1_ref[...], preferred_element_type=jnp.float32) + b1_ref[...]
    h = _gelu_exact(h)
    o_ref[...] += jnp.dot(
        h.astype(x.dtype), w2_ref[...], preferred_element_type=jnp.float32
    )

    @pl.when(j == pl.num_programs(1) - 1)
    def _():
        o_ref[...] = o_ref[...] + b2_ref[...]


def _mlp_kernel_stream_scratch(x_ref, w1_ref, b1_ref, w2_ref, b2_ref, o_ref, acc_ref):
    # Streamed H chunks with a separate f32 accumulator (non-f32 outputs).
    j = pl.program_id(1)

    @pl.when(j == 0)
    def _():
        acc_ref[...] = jnp.zeros_like(acc_ref)

    x = x_ref[...]
    h = jnp.dot(x, w1_ref[...], preferred_element_type=jnp.float32) + b1_ref[...]
    h = _gelu_exact(h)
    acc_ref[...] += jnp.dot(
        h.astype(x.dtype), w2_ref[...], preferred_element_type=jnp.float32
    )

    @pl.when(j == pl.num_programs(1) - 1)
    def _():
        o_ref[...] = (acc_ref[...] + b2_ref[...]).astype(o_ref.dtype)


# --------------------------------------------------------------------------- #
# Tiling / budget helpers (all pure-Python, trace-time)
# --------------------------------------------------------------------------- #
def _round_up(a, b):
    return ((a + b - 1) // b) * b


def _sublane(dtype):
    # Minimum sublane packing multiple: 8 for f32, 16 for bf16, 32 for int8/fp8.
    return max(8, 32 // jnp.dtype(dtype).itemsize)


def _vmem_budget_bytes():
    # Working-set budget for tile selection; stay well inside physical VMEM
    # (64 MiB per TC on v7x, 128 MiB on v5e/v6e).
    try:
        cap = int(pltpu.get_tpu_info().vmem_capacity_bytes)
    except Exception:
        cap = 64 * 1024 * 1024  # conservative (v7x) fallback
    return min(int(cap * 0.65), 80 * 1024 * 1024)


def _pick_tm(M, sub, lane_dense_out, max_tm=512):
    """Row tile: dtype/MXU aligned, <=10% padding waste, >=2 tiles when useful."""
    M_sub = _round_up(M, sub)
    cands = sorted(
        {c for c in (512, 256, 128, 64, 32, 16, 8)
         if c % sub == 0 and c <= min(M_sub, max_tm)} | {min(M_sub, max_tm)},
        reverse=True,
    )
    cands = [c for c in cands if c % sub == 0] or [sub]

    def stats(tm):
        m_pad = _round_up(M, tm)
        return m_pad // tm, (m_pad - M) / m_pad

    # Only insist on >=2 row tiles (v7x megacore) when the output is lane-dense;
    # for E < 128 (masked stores, tiny configs) prefer one bigger block.
    want_two = (M_sub >= 2 * sub) and lane_dense_out
    for tm in cands:
        n, waste = stats(tm)
        if waste <= 0.10 and (n >= 2 or not want_two):
            return tm
    for tm in cands:
        _, waste = stats(tm)
        if waste <= 0.10:
            return tm
    return cands[-1]  # smallest candidate -> minimal padding waste


def _resident_need(tm, E, H, in_isz, w_isz, out_isz):
    # Conservative: assume everything double-buffered by the pipeliner.
    return 2 * (tm * E * in_isz + (E * H + H * E + H + E) * w_isz + tm * E * out_isz)


def _stream_need(tm, th, E, in_isz, w_isz, out_isz, use_scratch):
    n = 2 * (tm * E * in_isz + (E * th + th * E + th + E) * w_isz + tm * E * out_isz)
    if use_scratch:
        n += tm * E * 4
    return n


def _pick_th(H, E, tm, in_isz, w_isz, out_isz, use_scratch, budget):
    cands = [c for c in (1024, 512, 256, 128) if c <= H and H % c == 0] or [H]
    for th in cands:
        if _stream_need(tm, th, E, in_isz, w_isz, out_isz, use_scratch) <= budget:
            return th
    return cands[-1]


# --------------------------------------------------------------------------- #
# Wrapper
# --------------------------------------------------------------------------- #
@jax.jit
def mlp_block(x, w1, b1, w2, b2):
    """x: (B, N, E); w1: (E, H); b1: (H,); w2: (H, E); b2: (E,).

    Weights are stored transposed vs. PyTorch nn.Linear (which keeps (out, in)),
    so the kernel computes x @ w1 and h @ w2 directly.
    """
    B, N, E = x.shape
    H = w1.shape[1]
    M = B * N

    in_isz = jnp.dtype(x.dtype).itemsize
    w_isz = jnp.dtype(w1.dtype).itemsize
    out_dtype = x.dtype
    out_isz = in_isz

    budget = _vmem_budget_bytes()

    # --- row tile ------------------------------------------------------------
    sub = _sublane(x.dtype)
    lane_dense_out = (E % 128) == 0
    # TODO(synk): for production E < 128, pack multiple row tiles into the lane
    # dimension for lane-dense stores instead of this row-blocked layout.
    tm = _pick_tm(M, sub, lane_dense_out)
    M_pad = _round_up(M, tm)
    n_row_tiles = M_pad // tm

    x2 = x.reshape(M, E)
    if M_pad != M:
        x2 = jnp.pad(x2, ((0, M_pad - M), (0, 0)))

    b1_2 = b1.reshape(1, H)
    b2_2 = b2.reshape(1, E)

    # --- choose resident vs streamed weights ---------------------------------
    resident_need = _resident_need(tm, E, H, in_isz, w_isz, out_isz)
    use_resident = resident_need <= budget

    if use_resident:
        need = resident_need
        grid = (n_row_tiles,)
        kernel = _mlp_kernel_resident
        in_specs = [
            pl.BlockSpec((tm, E), lambda i: (i, 0)),   # x row tile
            pl.BlockSpec((E, H), lambda i: (0, 0)),    # w1: resident (DMA once)
            pl.BlockSpec((1, H), lambda i: (0, 0)),    # b1: resident
            pl.BlockSpec((H, E), lambda i: (0, 0)),    # w2: resident
            pl.BlockSpec((1, E), lambda i: (0, 0)),    # b2: resident
        ]
        out_specs = pl.BlockSpec((tm, E), lambda i: (i, 0))
        scratch_shapes = []
        dim_sem = ("parallel",)
        weight_passes = 1
    else:
        use_scratch = out_dtype != jnp.float32
        th = _pick_th(H, E, tm, in_isz, w_isz, out_isz, use_scratch, budget)
        need = _stream_need(tm, th, E, in_isz, w_isz, out_isz, use_scratch)
        grid = (n_row_tiles, H // th)
        kernel = _mlp_kernel_stream_scratch if use_scratch else _mlp_kernel_stream_accout
        # TODO(synk): on v5e, if xprof shows the w1/w2 DMA exposed, add
        # pipeline_mode=pl.Buffered(3) to the two weight BlockSpecs below.
        in_specs = [
            pl.BlockSpec((tm, E), lambda i, j: (i, 0)),  # x tile (resident over j)
            pl.BlockSpec((E, th), lambda i, j: (0, j)),  # w1 chunk (streamed)
            pl.BlockSpec((1, th), lambda i, j: (0, j)),  # b1 chunk
            pl.BlockSpec((th, E), lambda i, j: (j, 0)),  # w2 chunk (streamed)
            pl.BlockSpec((1, E), lambda i, j: (0, 0)),   # b2
        ]
        out_specs = pl.BlockSpec((tm, E), lambda i, j: (i, 0))
        scratch_shapes = (
            [pltpu.VMEM((tm, E), jnp.float32)] if use_scratch else []
        )
        dim_sem = ("parallel", "arbitrary")
        weight_passes = n_row_tiles

    # --- VMEM limit: actual working set + headroom (not hard-coded) ----------
    vmem_limit = int(max(need + 8 * 1024 * 1024, 16 * 1024 * 1024))

    # --- cost estimate reflecting real traffic --------------------------------
    cost = pl.CostEstimate(
        flops=4 * M_pad * E * H,
        transcendentals=M_pad * H,
        bytes_accessed=int(
            M_pad * E * in_isz                       # x read
            + M_pad * E * out_isz                    # out write
            + weight_passes * (E * H + H * E) * w_isz  # weight reads (per pass)
            + (H + E) * w_isz                        # biases
        ),
    )

    out = pl.pallas_call(
        kernel,
        out_shape=jax.ShapeDtypeStruct((M_pad, E), out_dtype),
        grid_spec=pltpu.PrefetchScalarGridSpec(
            num_scalar_prefetch=0,
            grid=grid,
            in_specs=in_specs,
            out_specs=out_specs,
            scratch_shapes=scratch_shapes,
        ),
        compiler_params=pltpu.CompilerParams(
            dimension_semantics=dim_sem,
            vmem_limit_bytes=vmem_limit,
        ),
        cost_estimate=cost,
    )(x2, w1, b1_2, w2, b2_2)

    return out[:M].reshape(B, N, E)


def mlp_block_ref(x, w1, b1, w2, b2):
    """Pure-JAX reference of the PyTorch forward."""
    h = jnp.einsum("bne,eh->bnh", x, w1) + b1
    h = 0.5 * h * (1.0 + jax.lax.erf(h * _INV_SQRT2))
    return jnp.einsum("bnh,he->bne", h, w2) + b2


if __name__ == "__main__":
    # Small shapes consistent with MLPBlock(embedding_dim=32, mlp_dim=64)
    B, N, E, H = 2, 8, 32, 64

    key = jax.random.PRNGKey(0)
    kx, kw1, kb1, kw2, kb2 = jax.random.split(key, 5)

    x = jax.random.normal(kx, (B, N, E), dtype=jnp.float32)
    # nn.Linear parameters, stored transposed: PyTorch lin1.weight is (H, E) ->
    # we keep (E, H) so the kernel computes x @ w1.
    w1 = jax.random.normal(kw1, (E, H), dtype=jnp.float32) * 0.05
    b1 = jax.random.normal(kb1, (H,), dtype=jnp.float32) * 0.05
    w2 = jax.random.normal(kw2, (H, E), dtype=jnp.float32) * 0.05
    b2 = jax.random.normal(kb2, (E,), dtype=jnp.float32) * 0.05

    y = jax.block_until_ready(mlp_block(x, w1, b1, w2, b2))

    y_ref = mlp_block_ref(x, w1, b1, w2, b2)
    assert y.shape == (B, N, E)
    assert jnp.allclose(y, y_ref, atol=1e-5, rtol=1e-5), "mismatch vs reference"

    print("KERNEL_OK")
</pallas_src>

<mosaic_0001>
module attributes {stable_mosaic.version = 11 : i64} {
  func.func @_mlp_kernel_resident(%arg0: i32, %arg1: memref<16x32xf32, #tpu.memory_space<vmem>>, %arg2: memref<32x64xf32, #tpu.memory_space<vmem>>, %arg3: memref<1x64xf32, #tpu.memory_space<vmem>>, %arg4: memref<64x32xf32, #tpu.memory_space<vmem>>, %arg5: memref<1x32xf32, #tpu.memory_space<vmem>>, %arg6: memref<16x32xf32, #tpu.memory_space<vmem>>) attributes {dimension_semantics = [#tpu.dimension_semantics<parallel>], iteration_bounds = array<i64: 1>, scalar_prefetch = 0 : i64, scratch_operands = 0 : i64, tpu.core_type = #tpu.core_type<tc>, window_params = [{transform_indices = @transform_0, window_bounds = array<i64: 16, 32>}, {pipeline_mode = #tpu.pipeline_mode<synchronous>, transform_indices = @transform_1, window_bounds = array<i64: 32, 64>}, {pipeline_mode = #tpu.pipeline_mode<synchronous>, transform_indices = @transform_2, window_bounds = array<i64: 1, 64>}, {pipeline_mode = #tpu.pipeline_mode<synchronous>, transform_indices = @transform_3, window_bounds = array<i64: 64, 32>}, {pipeline_mode = #tpu.pipeline_mode<synchronous>, transform_indices = @transform_4, window_bounds = array<i64: 1, 32>}, {transform_indices = @transform_5, window_bounds = array<i64: 16, 32>}]} {
    %c0 = arith.constant 0 : index
    %c0_0 = arith.constant 0 : index
    %0 = vector.load %arg1[%c0, %c0_0] : memref<16x32xf32, #tpu.memory_space<vmem>>, vector<16x32xf32>
    %c0_1 = arith.constant 0 : index
    %c0_2 = arith.constant 0 : index
    %1 = vector.load %arg2[%c0_1, %c0_2] : memref<32x64xf32, #tpu.memory_space<vmem>>, vector<32x64xf32>
    %cst = arith.constant dense<0.000000e+00> : vector<16x64xf32>
    %2 = tpu.matmul %0, %1, %cst {dimension_numbers = #tpu.dot_dimension_numbers<[1], [0], [0], [1], [0, 0, 1, 1], [], []>} : vector<16x32xf32>, vector<32x64xf32>, vector<16x64xf32> -> vector<16x64xf32>
    %c0_3 = arith.constant 0 : index
    %c0_4 = arith.constant 0 : index
    %3 = vector.load %arg3[%c0_3, %c0_4] : memref<1x64xf32, #tpu.memory_space<vmem>>, vector<1x64xf32>
    %4 = vector.broadcast %3 : vector<1x64xf32> to vector<16x64xf32>
    %5 = arith.addf %2, %4 : vector<16x64xf32>
    %cst_5 = arith.constant 5.000000e-01 : f32
    %6 = vector.broadcast %cst_5 : f32 to vector<16x64xf32>
    %7 = arith.mulf %6, %5 : vector<16x64xf32>
    %cst_6 = arith.constant 0.707106769 : f32
    %8 = vector.broadcast %cst_6 : f32 to vector<16x64xf32>
    %9 = arith.mulf %5, %8 : vector<16x64xf32>
    %10 = math.erf %9 : vector<16x64xf32>
    %cst_7 = arith.constant 1.000000e+00 : f32
    %11 = vector.broadcast %cst_7 : f32 to vector<16x64xf32>
    %12 = arith.addf %11, %10 : vector<16x64xf32>
    %13 = arith.mulf %7, %12 : vector<16x64xf32>
    %c0_8 = arith.constant 0 : index
    %c0_9 = arith.constant 0 : index
    %14 = vector.load %arg4[%c0_8, %c0_9] : memref<64x32xf32, #tpu.memory_space<vmem>>, vector<64x32xf32>
    %cst_10 = arith.constant dense<0.000000e+00> : vector<16x32xf32>
    %15 = tpu.matmul %13, %14, %cst_10 {dimension_numbers = #tpu.dot_dimension_numbers<[1], [0], [0], [1], [0, 0, 1, 1], [], []>} : vector<16x64xf32>, vector<64x32xf32>, vector<16x32xf32> -> vector<16x32xf32>
    %c0_11 = arith.constant 0 : index
    %c0_12 = arith.constant 0 : index
    %16 = vector.load %arg5[%c0_11, %c0_12] : memref<1x32xf32, #tpu.memory_space<vmem>>, vector<1x32xf32>
    %17 = vector.broadcast %16 : vector<1x32xf32> to vector<16x32xf32>
    %18 = arith.addf %15, %17 : vector<16x32xf32>
    %c0_13 = arith.constant 0 : index
    %c0_14 = arith.constant 0 : index
    %19 = vector.load %arg6[%c0_13, %c0_14] : memref<16x32xf32, #tpu.memory_space<vmem>>, vector<16x32xf32>
    tpu.vector_store %arg6[%c0_13, %c0_14], %18 {strides = array<i32>} : memref<16x32xf32, #tpu.memory_space<vmem>>, vector<16x32xf32>,
    return
  }
  func.func @transform_0(%arg0: i32) -> (i32, i32) {
    %c0_i32 = arith.constant 0 : i32
    %c0_i32_0 = arith.constant 0 : i32
    return %arg0, %c0_i32 : i32, i32
  }
  func.func @transform_1(%arg0: i32) -> (i32, i32) {
    %c0_i32 = arith.constant 0 : i32
    %c0_i32_0 = arith.constant 0 : i32
    %c0_i32_1 = arith.constant 0 : i32
    return %c0_i32, %c0_i32_0 : i32, i32
  }
  func.func @transform_2(%arg0: i32) -> (i32, i32) {
    %c0_i32 = arith.constant 0 : i32
    %c0_i32_0 = arith.constant 0 : i32
    %c0_i32_1 = arith.constant 0 : i32
    return %c0_i32, %c0_i32_0 : i32, i32
  }
  func.func @transform_3(%arg0: i32) -> (i32, i32) {
    %c0_i32 = arith.constant 0 : i32
    %c0_i32_0 = arith.constant 0 : i32
    %c0_i32_1 = arith.constant 0 : i32
    return %c0_i32, %c0_i32_0 : i32, i32
  }
  func.func @transform_4(%arg0: i32) -> (i32, i32) {
    %c0_i32 = arith.constant 0 : i32
    %c0_i32_0 = arith.constant 0 : i32
    %c0_i32_1 = arith.constant 0 : i32
    return %c0_i32, %c0_i32_0 : i32, i32
  }
  func.func @transform_5(%arg0: i32) -> (i32, i32) {
    %c0_i32 = arith.constant 0 : i32
    %c0_i32_0 = arith.constant 0 : i32
    return %arg0, %c0_i32 : i32, i32
  }
}

</mosaic_0001>

<llo_original>
// kernel: mlp_block.1
$region0: #{mlp_block.1}
  #allocation0 [shape = 'u32[]', space=smem, size = 0x4, offset = 0x4, fixed_abs, tag = 'smem constant byte address 0x4 - core index']
  #allocation1 [shape = 'u32[72,128]{1,0:T(1,128)}', space=vmem, size = 0x9000, scoped, tag = 'internal scratch']
  %s0 = inlined_call_operand.vmem [shape: f32[16,32], index: 0, kind: input, shape index: {}]
  %s1 = inlined_call_operand.vmem [shape: f32[32,64], index: 1, kind: input, shape index: {}]
  %s2 = inlined_call_operand.vmem [shape: f32[1,64], index: 2, kind: input, shape index: {}]
  %s3 = inlined_call_operand.vmem [shape: f32[64,32], index: 3, kind: input, shape index: {}]
  %s4 = inlined_call_operand.vmem [shape: f32[1,32], index: 4, kind: input, shape index: {}]
  %s5 = inlined_call_operand.hbm [shape: f32[16,32], index: 5, kind: output, shape index: {}]
  %s6 = sld [smem:[#allocation0]]
  $region30: #{mlp_block.1} parent=0
    _
  %s8 = ssub.s32 1, %s6
  %s9 = scalar_select 0, %s8, %s6
  $region1: #{mlp_block.1} parent=0
    #allocation2 [shape = 'u8[8192]{0}', space=vmem, size = 0x2000, scoped, tag = 'output window, operand 0, single buffered']
    #allocation3 [shape = 's32[1]{0}', space=sflag, size = 0x4, scoped, tag = 'scoped memory for mlp_block.1']
    %10 = vsyncpa [#allocation3], 0
    // Predicated region
    $region2: #{mlp_block.1} parent=1 // pred_check
      _
    $region3: #{mlp_block.1} parent=1 // pred_check_branch
      %12 = sbr.rel (0) target = $region5
    $region4: #{mlp_block.1} parent=1 // pred_region
      _
    $region5: #{mlp_block.1} parent=1 // pred_fallthru
      _
    // Predicated region
    $region6: #{mlp_block.1} parent=1 // pred_check
      _
    $region7: #{mlp_block.1} parent=1 // pred_check_branch
      %14 = sbr.rel (0) target = $region9
    $region8: #{mlp_block.1} parent=1 // pred_region
      _
    $region9: #{mlp_block.1} parent=1 // pred_fallthru
      _
    // Predicated region
    $region10: #{mlp_block.1} parent=1 // pred_check
      _
    $region11: #{mlp_block.1} parent=1 // pred_check_branch
      %16 = sbr.rel (0) target = $region13
    $region12: #{mlp_block.1} parent=1 // pred_region
      _
    $region13: #{mlp_block.1} parent=1 // pred_fallthru
      _
    // Predicated region
    $region14: #{mlp_block.1} parent=1 // pred_check
      _
    $region15: #{mlp_block.1} parent=1 // pred_check_branch
      %18 = sbr.rel (0) target = $region17
    $region16: #{mlp_block.1} parent=1 // pred_region
      _
    $region17: #{mlp_block.1} parent=1 // pred_fallthru
      _
    // Predicated region
    $region18: #{mlp_block.1} parent=1 // pred_check
      _
    $region19: #{mlp_block.1} parent=1 // pred_check_branch
      %20 = sbr.rel (0) target = $region21
    $region20: #{mlp_block.1} parent=1 // pred_region
      _
    $region21: #{mlp_block.1} parent=1 // pred_fallthru
      _
    %v21 = vld [vmem:[%s0] sm:$0xff]
    %v22 = vld [vmem:[%s0 + $0x8] sm:$0xff]
    %v23 = vld [vmem:[%s1] sm:$0xff]
    %v24 = vld [vmem:[%s1 + $0x8] sm:$0xff]
    %v25 = vld [vmem:[%s1 + $0x10] sm:$0xff]
    %v26 = vld [vmem:[%s1 + $0x18] sm:$0xff]
    %v27 = vld [vmem:[%s2] sm:$0x1]
    %v29 = vperm.slane %v27, 0
    %vm31 = vcmask 261120
    %v33 = vsel %vm31, %v21, 0
    %v36 = vsel %vm31, %v22, 0
    %38 = vmatpush.msra.mxu0 0.0
    %39 = vmatpush.msra.mxu0 0.0
    %40 = vmatpush.msra.mxu0 0.0
    %41 = vmatpush.msra.mxu0 0.0
    %42 = vmatpush.msra.mxu0 0.0
    %43 = vmatpush.msra.mxu0 0.0
    %44 = vmatpush.msra.mxu0 0.0
    %45 = vmatpush.msra.mxu0 0.0
    %46 = vmatpush.msra.mxu0 0.0
    %47 = vmatpush.msra.mxu0 0.0
    %48 = vmatpush.msra.mxu0 0.0
    %49 = vmatpush.msra.mxu0 0.0
    %50 = vmatpush.msra.mxu0 %v26
    %51 = vmatpush.msra.mxu0 %v25
    %52 = vmatpush.msra.mxu0 %v24
    %53 = vmatpush.msra.mxu0 %v23
    %54 = vmatmul.f32.gmra.mxu0 %v33
    %v55 = vpop.f32.mrf.mxu0
    %v56 = vadd.f32 %v29, %v55
    %57 = vmatmul.f32.gmra.mxu0 %v36
    %v58 = vpop.f32.mrf.mxu0
    %v59 = vadd.f32 %v29, %v58
    %60 = vdwg.mxu0
    %v61 = vmul.f32 %v56, 0.5
    %v62 = vmul.f32 %v59, 0.5
    %v63 = vmul.f32 %v56, 0.70710677
    %v64 = vmul.f32 %v59, 0.70710677
    %v65 = vmul.f32 %v63, %v63
    %v66 = vmin.f32 16.0, %v65
    %v67 = vmul.f32 %v66, 2.1237322e-06
    %v68 = vadd.f32 %v67, 0.00028619796
    %v69 = vmul.f32 %v66, %v68
    %v70 = vadd.f32 %v69, 0.0036580483
    %v71 = vmul.f32 %v66, %v70
    %v72 = vadd.f32 %v71, 0.05243302
    %v73 = vmul.f32 %v66, %v72
    %v74 = vadd.f32 %v73, 0.18741608
    %v75 = vmul.f32 %v66, %v74
    %v76 = vadd.f32 %v75, 1.1283791
    %v77 = vmul.f32 %v63, %v76
    %v78 = vmul.f32 %v66, 3.8918573e-05
    %v79 = vadd.f32 %v78, 0.001143296
    %v80 = vmul.f32 %v66, %v79
    %v81 = vadd.f32 %v80, 0.014752088
    %v82 = vmul.f32 %v66, %v81
    %v83 = vadd.f32 %v82, 0.112945676
    %v84 = vmul.f32 %v66, %v83
    %v85 = vadd.f32 %v84, 0.4994258
    %v86 = vmul.f32 %v66, %v85
    %v87 = vadd.f32 %v86, 1.0
    %v88 = vrcp.pop %v87
    %v89 = vmul.f32 %v87, %v88
    %v90 = vsub.f32 1.0, %v89
    %v91 = vmul.f32 %v88, %v90
    %v92 = vadd.f32 %v88, %v91
    %vm93 = vweird.f32 %v87
    %vm94 = vweird.f32 %v88
    %vm95 = vmor %vm93, %vm94
    %v96 = vsel %vm95, %v88, %v92
    %v97 = vand.u32 2147483647, %v87
    %vm98 = vcmp.eq.f32.partialorder %v97, 8.507059e+37
    %v99 = vand.u32 %v87, 2147483648
    %v100 = vor.u32 1.1754944e-38, %v99
    %v101 = vsel %vm98, %v100, %v96
    %v102 = vmul.f32 %v77, %v101
    %v103 = vmin.f32 %v102, 1.0
    %v104 = vmax.f32 %v103, -1.0
    %v105 = vmul.f32 %v64, %v64
    %v106 = vmin.f32 16.0, %v105
    %v107 = vmul.f32 %v106, 2.1237322e-06
    %v108 = vadd.f32 %v107, 0.00028619796
    %v109 = vmul.f32 %v106, %v108
    %v110 = vadd.f32 %v109, 0.0036580483
    %v111 = vmul.f32 %v106, %v110
    %v112 = vadd.f32 %v111, 0.05243302
    %v113 = vmul.f32 %v106, %v112
    %v114 = vadd.f32 %v113, 0.18741608
    %v115 = vmul.f32 %v106, %v114
    %v116 = vadd.f32 %v115, 1.1283791
    %v117 = vmul.f32 %v64, %v116
    %v118 = vmul.f32 %v106, 3.8918573e-05
    %v119 = vadd.f32 %v118, 0.001143296
    %v120 = vmul.f32 %v106, %v119
    %v121 = vadd.f32 %v120, 0.014752088
    %v122 = vmul.f32 %v106, %v121
    %v123 = vadd.f32 %v122, 0.112945676
    %v124 = vmul.f32 %v106, %v123
    %v125 = vadd.f32 %v124, 0.4994258
    %v126 = vmul.f32 %v106, %v125
    %v127 = vadd.f32 %v126, 1.0
    %v128 = vrcp.pop %v127
    %v129 = vmul.f32 %v127, %v128
    %v130 = vsub.f32 1.0, %v129
    %v131 = vmul.f32 %v128, %v130
    %v132 = vadd.f32 %v128, %v131
    %vm133 = vweird.f32 %v127
    %vm134 = vweird.f32 %v128
    %vm135 = vmor %vm133, %vm134
    %v136 = vsel %vm135, %v128, %v132
    %v137 = vand.u32 2147483647, %v127
    %vm138 = vcmp.eq.f32.partialorder %v137, 8.507059e+37
    %v139 = vand.u32 %v127, 2147483648
    %v140 = vor.u32 1.1754944e-38, %v139
    %v141 = vsel %vm138, %v140, %v136
    %v142 = vmul.f32 %v117, %v141
    %v143 = vmin.f32 %v142, 1.0
    %v144 = vmax.f32 %v143, -1.0
    %v145 = vadd.f32 %v104, 1.0
    %v146 = vadd.f32 %v144, 1.0
    %v147 = vmul.f32 %v61, %v145
    %v148 = vmul.f32 %v62, %v146
    %v149 = vld [vmem:[%s3] sm:$0xff]
    %v150 = vld [vmem:[%s3 + $0x8] sm:$0xff]
    %v151 = vld [vmem:[%s3 + $0x10] sm:$0xff]
    %v152 = vld [vmem:[%s3 + $0x18] sm:$0xff]
    %v153 = vld [vmem:[%s3 + $0x20] sm:$0xff]
    %v154 = vld [vmem:[%s3 + $0x28] sm:$0xff]
    %v155 = vld [vmem:[%s3 + $0x30] sm:$0xff]
    %v156 = vld [vmem:[%s3 + $0x38] sm:$0xff]
    %v157 = vld [vmem:[%s4] sm:$0x1]
    %v159 = vperm.slane %v157, 0
    %vm161 = vcmask 523264
    %v163 = vsel %vm161, %v147, 0
    %v166 = vsel %vm161, %v148, 0
    %168 = vmatpush.msra.mxu0 0.0
    %169 = vmatpush.msra.mxu0 0.0
    %170 = vmatpush.msra.mxu0 0.0
    %171 = vmatpush.msra.mxu0 0.0
    %172 = vmatpush.msra.mxu0 0.0
    %173 = vmatpush.msra.mxu0 0.0
    %174 = vmatpush.msra.mxu0 0.0
    %175 = vmatpush.msra.mxu0 0.0
    %176 = vmatpush.msra.mxu0 %v156
    %177 = vmatpush.msra.mxu0 %v155
    %178 = vmatpush.msra.mxu0 %v154
    %179 = vmatpush.msra.mxu0 %v153
    %180 = vmatpush.msra.mxu0 %v152
    %181 = vmatpush.msra.mxu0 %v151
    %182 = vmatpush.msra.mxu0 %v150
    %183 = vmatpush.msra.mxu0 %v149
    %184 = vmatmul.f32.gmra.mxu0 %v163
    %v185 = vpop.f32.mrf.mxu0
    %v186 = vadd.f32 %v159, %v185
    %187 = vmatmul.f32.gmra.mxu0 %v166
    %v188 = vpop.f32.mrf.mxu0
    %v189 = vadd.f32 %v159, %v188
    %190 = vdwg.mxu0
    %191 = vst.msk [vmem:[#allocation2] sm:$0xff] %vm31, %v186
    %192 = vst.msk [vmem:[#allocation2 + $0x8] sm:$0xff] %vm31, %v189
    // Predicated region
    $region22: #{mlp_block.1} parent=1 // pred_check
      _
    $region23: #{mlp_block.1} parent=1 // pred_check_branch
      %194 = sbr.rel (0) target = $region25
    $region24: #{mlp_block.1} parent=1 // pred_region
      %196 = vsyncadd [#allocation3], 0
      %s197 = sshll.u32 [#allocation2], 4
      %s198 = int_to_ptr.vmem [resolvable:$true] %s197
      %s199 = sshll.u32 %s5, 4
      %s200 = int_to_ptr.hbm [resolvable:$true] %s199
      %205 = dma.vmem_to_hbm [thread:$0]  %s198, 256, %s200, [#allocation3], 128, 128, 8
    $region25: #{mlp_block.1} parent=1 // pred_fallthru
      _
    // Predicated region
    $region26: #{mlp_block.1} parent=1 // pred_check
      _
    $region27: #{mlp_block.1} parent=1 // pred_check_branch
      %207 = sbr.rel (0) target = $region29
    $region28: #{mlp_block.1} parent=1 // pred_region
      %209 = dma.done [#allocation3], 256
    $region29: #{mlp_block.1} parent=1 // pred_fallthru
      _
    %210 = vsyncpa [#allocation3], 1

</llo_original>
